<compile_context>
chip_gen: v7x
topology: tpu7x:2x2x1
jax: 0.10.0
libtpu: 0.0.40
codegen_flags: <defaults>
</compile_context>

<pallas_src>
import jax
import jax.numpy as jnp
from jax.experimental import pallas as pl
from jax.experimental.pallas import tpu as pltpu

EPSILON = 1e-4


def _bifpn_concat2_kernel(nw_ref, x0_ref, x1_ref, out_ref):
    # nw_ref: (2,) normalized fusion weights, scalar-prefetched into SMEM once for
    # the whole grid.  Cast the scalars to the input dtype so bf16 tiles are scaled
    # natively (one packed vreg per [16,128] tile on v6e/v7x); no-op for f32.
    s0 = nw_ref[0].astype(x0_ref.dtype)
    s1 = nw_ref[1].astype(x1_ref.dtype)

    c = x0_ref.shape[1]  # channels of one input (full extent per tile, static)
    # Lane dim (flattened H*W tile) is a multiple of 128 -> full-vreg, unmasked stores.
    # Note: if C is not a multiple of the sublane tile, the second-half store is
    # sublane-masked; correctness is unaffected and the op stays DMA-bound.
    out_ref[:, :c, :] = (s0 * x0_ref[...]).astype(out_ref.dtype)
    out_ref[:, c:, :] = (s1 * x1_ref[...]).astype(out_ref.dtype)


def _vmem_budgets():
    """Generation-aware (double-buffered footprint budget, vmem_limit_bytes)."""
    try:
        cap = int(pltpu.get_tpu_info().vmem_capacity_bytes)
    except Exception:
        cap = 64 * 1024 * 1024  # conservative default (v7x per-TC VMEM)
    # v7x (64 MiB):  footprint <= 24 MiB, limit 48 MiB.
    # v5e/v6e (128 MiB): footprint <= 48 MiB, limit 64 MiB.
    footprint = min(cap * 3 // 8, 48 * 1024 * 1024)
    limit = min(cap * 3 // 4, 64 * 1024 * 1024)
    return footprint, limit


def _pick_spatial_block(s, c, itemsize, footprint_budget):
    """Largest lane-dense spatial tile whose double-buffered footprint fits the budget.

    Footprint ~= 2 * (x0_tile + x1_tile + out_tile) = 8 * C * SB * itemsize bytes.
    Returns None when even the minimum 128-lane tile would blow the budget
    (caller falls back to plain XLA).  `s` is assumed to be a multiple of 128.
    """
    bytes_per_lane = 8 * c * itemsize
    max_sb = (footprint_budget // bytes_per_lane) // 128 * 128
    if max_sb < 128:
        return None
    sb = min(s, max_sb)            # prefer the FULL spatial extent when it fits
    sb = (sb // 128) * 128
    # Prefer a tile that evenly divides S so every block is full (no ragged tail).
    while sb > 128 and s % sb != 0:
        sb -= 128
    return sb


def bifpn_concat2(w, x0, x1):
    """w: (2,) fusion weights; x0, x1: same-shaped NCHW tensors."""
    assert x0.shape == x1.shape, "BiFPN_Concat2 expects two same-shaped inputs"
    assert x0.dtype == x1.dtype
    n, c, h, wd = x0.shape
    s = h * wd

    # Normalize the fusion weights once (f32, exactly the PyTorch forward math).
    w = jnp.asarray(w, jnp.float32)
    nw = w / (jnp.sum(w) + EPSILON)

    itemsize = jnp.dtype(x0.dtype).itemsize
    footprint_budget, vmem_limit = _vmem_budgets()

    sb = _pick_spatial_block(s, c, itemsize, footprint_budget) if s % 128 == 0 else None
    if sb is None:
        # Tiny / ragged levels (H*W % 128 != 0) or huge-C corner cases: masked
        # narrow-lane stores + degenerate grids make the kernel a loss; let XLA fuse.
        return jnp.concatenate([nw[0] * x0, nw[1] * x1], axis=1).astype(x0.dtype)

    # Lane-dense layout: last dim is the flattened spatial extent.
    x0f = x0.reshape(n, c, s)
    x1f = x1.reshape(n, c, s)

    grid = (n, s // sb)

    out_flat = pl.pallas_call(
        _bifpn_concat2_kernel,
        out_shape=jax.ShapeDtypeStruct((n, 2 * c, s), x0.dtype),
        grid_spec=pltpu.PrefetchScalarGridSpec(
            # Normalized weights are scalar-prefetched: resident in SMEM before the
            # grid runs, no per-step copy or renormalization.
            num_scalar_prefetch=1,
            grid=grid,
            in_specs=[
                # One batch element, full channel extent, SB-wide spatial tile.
                pl.BlockSpec((1, c, sb), lambda i, j, nw_ref: (i, 0, j)),
                pl.BlockSpec((1, c, sb), lambda i, j, nw_ref: (i, 0, j)),
            ],
            # Output tile covers both concat halves (2C channels) of the same
            # (batch, spatial) tile; with SB == S it is one contiguous HBM slab.
            out_specs=pl.BlockSpec((1, 2 * c, sb), lambda i, j, nw_ref: (i, 0, j)),
        ),
        compiler_params=pltpu.CompilerParams(
            # Independent output tiles on both axes -> megacore sharding.
            dimension_semantics=("parallel", "parallel"),
            vmem_limit_bytes=vmem_limit,
        ),
    )(nw, x0f, x1f)

    return out_flat.reshape(n, 2 * c, h, wd)


def bifpn_concat2_ref(w, x0, x1):
    """Pure-JAX reference mirroring the PyTorch forward."""
    w = jnp.asarray(w, jnp.float32)
    weight = w / (jnp.sum(w) + EPSILON)
    return jnp.concatenate([weight[0] * x0, weight[1] * x1], axis=1).astype(x0.dtype)


if __name__ == "__main__":
    # Deterministic parameter init, same as nn.Parameter(torch.ones(2)).
    w = jnp.ones((2,), dtype=jnp.float32)

    key = jax.random.PRNGKey(0)
    k0, k1 = jax.random.split(key)

    # Kernel path: batch=2, channels=4, spatial=16x16 (H*W = 256, lane-dense).
    x0 = jax.random.normal(k0, (2, 4, 16, 16), dtype=jnp.float32)
    x1 = jax.random.normal(k1, (2, 4, 16, 16), dtype=jnp.float32)
    out = jax.block_until_ready(bifpn_concat2(w, x0, x1))
    expected = bifpn_concat2_ref(w, x0, x1)
    assert out.shape == (2, 8, 16, 16), out.shape
    assert jnp.allclose(out, expected, atol=1e-6, rtol=1e-6), "mismatch vs reference"

    # Fallback path sanity check (5x5 level: H*W % 128 != 0 -> plain XLA fusion).
    k2, k3 = jax.random.split(k1)
    y0 = jax.random.normal(k2, (2, 4, 5, 5), dtype=jnp.float32)
    y1 = jax.random.normal(k3, (2, 4, 5, 5), dtype=jnp.float32)
    out2 = jax.block_until_ready(bifpn_concat2(w, y0, y1))
    assert jnp.allclose(out2, bifpn_concat2_ref(w, y0, y1), atol=1e-6, rtol=1e-6)

    print("KERNEL_OK")
</pallas_src>

<mosaic_0001>
module attributes {stable_mosaic.version = 11 : i64} {
  func.func @_bifpn_concat2_kernel(%arg0: i32, %arg1: i32, %arg2: memref<2xf32, #tpu.memory_space<smem>>, %arg3: memref<1x4x256xf32, #tpu.memory_space<vmem>>, %arg4: memref<1x4x256xf32, #tpu.memory_space<vmem>>, %arg5: memref<1x8x256xf32, #tpu.memory_space<vmem>>) attributes {dimension_semantics = [#tpu.dimension_semantics<parallel>, #tpu.dimension_semantics<parallel>], iteration_bounds = array<i64: 2, 1>, scalar_prefetch = 1 : i64, scratch_operands = 0 : i64, tpu.core_type = #tpu.core_type<tc>, window_params = [{transform_indices = @transform_0, window_bounds = array<i64: 1, 4, 256>}, {transform_indices = @transform_1, window_bounds = array<i64: 1, 4, 256>}, {transform_indices = @transform_2, window_bounds = array<i64: 1, 8, 256>}]} {
    %c0 = arith.constant 0 : index
    %0 = memref.load %arg2[%c0] : memref<2xf32, #tpu.memory_space<smem>>
    %c1 = arith.constant 1 : index
    %1 = memref.load %arg2[%c1] : memref<2xf32, #tpu.memory_space<smem>>
    %c0_0 = arith.constant 0 : index
    %c0_1 = arith.constant 0 : index
    %c0_2 = arith.constant 0 : index
    %2 = vector.load %arg3[%c0_0, %c0_1, %c0_2] : memref<1x4x256xf32, #tpu.memory_space<vmem>>, vector<1x4x256xf32>
    %3 = vector.broadcast %0 : f32 to vector<1x4x256xf32>
    %4 = arith.mulf %3, %2 : vector<1x4x256xf32>
    %c0_3 = arith.constant 0 : index
    %c0_4 = arith.constant 0 : index
    %c0_5 = arith.constant 0 : index
    %5 = vector.load %arg5[%c0_3, %c0_4, %c0_5] : memref<1x8x256xf32, #tpu.memory_space<vmem>>, vector<1x4x256xf32>
    tpu.vector_store %arg5[%c0_3, %c0_4, %c0_5], %4 {strides = array<i32>} : memref<1x8x256xf32, #tpu.memory_space<vmem>>, vector<1x4x256xf32>,
    %c0_6 = arith.constant 0 : index
    %c0_7 = arith.constant 0 : index
    %c0_8 = arith.constant 0 : index
    %6 = vector.load %arg4[%c0_6, %c0_7, %c0_8] : memref<1x4x256xf32, #tpu.memory_space<vmem>>, vector<1x4x256xf32>
    %7 = vector.broadcast %1 : f32 to vector<1x4x256xf32>
    %8 = arith.mulf %7, %6 : vector<1x4x256xf32>
    %c0_9 = arith.constant 0 : index
    %c4 = arith.constant 4 : index
    %c0_10 = arith.constant 0 : index
    %9 = vector.load %arg5[%c0_9, %c4, %c0_10] : memref<1x8x256xf32, #tpu.memory_space<vmem>>, vector<1x4x256xf32>
    tpu.vector_store %arg5[%c0_9, %c4, %c0_10], %8 {strides = array<i32>} : memref<1x8x256xf32, #tpu.memory_space<vmem>>, vector<1x4x256xf32>,
    return
  }
  func.func @transform_0(%arg0: i32, %arg1: i32, %arg2: memref<2xf32, #tpu.memory_space<smem>>) -> (i32, i32, i32) {
    %c0_i32 = arith.constant 0 : i32
    %c0_i32_0 = arith.constant 0 : i32
    return %arg0, %c0_i32, %arg1 : i32, i32, i32
  }
  func.func @transform_1(%arg0: i32, %arg1: i32, %arg2: memref<2xf32, #tpu.memory_space<smem>>) -> (i32, i32, i32) {
    %c0_i32 = arith.constant 0 : i32
    %c0_i32_0 = arith.constant 0 : i32
    return %arg0, %c0_i32, %arg1 : i32, i32, i32
  }
  func.func @transform_2(%arg0: i32, %arg1: i32, %arg2: memref<2xf32, #tpu.memory_space<smem>>) -> (i32, i32, i32) {
    %c0_i32 = arith.constant 0 : i32
    %c0_i32_0 = arith.constant 0 : i32
    return %arg0, %c0_i32, %arg1 : i32, i32, i32
  }
}

</mosaic_0001>

<llo_original>
// kernel: tpu_custom_call.1
$region0: #{tpu_custom_call.1}
  #allocation0 [shape = 'u32[]', space=smem, size = 0x4, offset = 0x4, fixed_abs, tag = 'smem constant byte address 0x4 - core index']
  #allocation1 [shape = 'u32[144,128]{1,0:T(1,128)}', space=vmem, size = 0x12000, scoped, tag = 'internal scratch']
  #allocation2 [shape = 's32[1]{0}', space=sflag, size = 0x4, scoped, tag = 'scoped memory for tpu_custom_call.1']
  #allocation3 [shape = 'u8[512]{0}', space=smem, size = 0x200, scoped, tag = 'prefetched SMEM operand 0']
  %s0 = inlined_call_operand.hbm [shape: f32[2], index: 0, kind: input, shape index: {}]
  %s1 = inlined_call_operand.hbm [shape: f32[2,4,256], index: 1, kind: input, shape index: {}]
  %s2 = inlined_call_operand.hbm [shape: f32[2,4,256], index: 2, kind: input, shape index: {}]
  %s3 = inlined_call_operand.hbm [shape: f32[2,8,256], index: 3, kind: output, shape index: {}]
  %s4 = sld [smem:[#allocation0]]
  $region49: #{tpu_custom_call.1} parent=0
    _
  %s6 = ssub.s32 1, %s4
  %s7 = scalar_select 0, %s6, %s4
  %9 = dma.hbm_to_smem %s0, 16, [#allocation3], [#allocation2]
  %10 = dma.done [#allocation2], 16
  %11 = sfence
  $region1: #{tpu_custom_call.1} parent=0
    #allocation4 [shape = 'u8[8192]{0}', space=vmem, size = 0x2000, scoped, tag = 'input window, operand 1']
    #allocation5 [shape = 's32[2]{0}', space=sflag, size = 0x8, scoped, tag = 'scoped memory for tpu_custom_call.1']
    #allocation6 [shape = 's32[2]{0}', space=sflag, size = 0x8, scoped, tag = 'scoped memory for tpu_custom_call.1']
    #allocation7 [shape = 'u8[8192]{0}', space=vmem, size = 0x2000, scoped, tag = 'input window, operand 2']
    #allocation8 [shape = 's32[2]{0}', space=sflag, size = 0x8, scoped, tag = 'scoped memory for tpu_custom_call.1']
    #allocation9 [shape = 'u8[16384]{0}', space=vmem, size = 0x4000, scoped, tag = 'output window, operand 0']
    %12 = vsyncpa [#allocation5], 0
    %s13 = scalar_lea.sflag [#allocation5], 1
    %14 = vsyncpa %s13, 0
    %15 = vsyncpa [#allocation8], 0
    %s16 = scalar_lea.sflag [#allocation8], 1
    %17 = vsyncpa %s16, 0
    %18 = vsyncpa [#allocation6], 0
    %s19 = scalar_lea.sflag [#allocation6], 1
    %20 = vsyncpa %s19, 0
    loop: start=0, step=1, limit=4
    $region2: #{tpu_custom_call.1} parent=1 // loop_pre_header
      _
    $region3: #{tpu_custom_call.1} parent=1 // loop_header
      %s22 = sphi 0, %s26
      %p23 = scmp.ge.s32.totalorder %s22, 4
      %s29 = sphi 0, %s41
      %s30 = sphi 0, %s37
      %s31 = sphi 0, %s29
      %s32 = sphi 0, %s30
      %s33 = sphi 0, %s31
      %s34 = sphi 0, %s32
      %s46 = sphi 0, %s48
      %s49 = sphi 0, %s46
      %s50 = sphi 0, %s49
      %s66 = sphi 0, %s50
      %s74 = sphi 0, %s76
      %s77 = sphi 0, %s74
      %s78 = sphi 0, %s77
      %s94 = sphi 0, %s78
      %s102 = sphi 0, %s104
      %s105 = sphi 0, %s102
      %s106 = sphi 0, %s105
      %s122 = sphi 0, %s106
    $region4: #{tpu_custom_call.1} parent=1 // loop_header_branch
      %25 = sbr.rel (%p23) target = $region8
    $region5: #{tpu_custom_call.1} parent=1 // loop_body
      %s27 = ssub.s32 %s22, 1
      %s28 = ssub.s32 %s22, 2
      %s35 = sadd.s32 1, %s30
      %p36 = scmp.ge.s32.totalorder %s35, 1
      %s37 = scalar_select %p36, 0, %s35
      %s38 = sadd.s32 1, %s29
      %s39 = scalar_select %p36, %s38, %s29
      %p40 = scmp.ge.s32.totalorder %s39, 2
      %s41 = scalar_select %p40, 0, %s39
      %s42 = ssub.s32 %s29, %s41
      %s43 = ssub.s32 %s30, %s37
      %s44 = sor.u32 %s42, %s43
      %p45 = scmp.eq.s32.totalorder %s44, 0
      %s47 = sadd.s32 %s46, 1
      %s48 = scalar_select %p45, %s46, %s47
      %p51 = pneg %p45
      %p52 = scmp.eq.s32.totalorder %s22, 1
      %p53 = por %p51, %p52
      %p54 = scmp.ne.s32.totalorder %s46, %s49
      %p55 = scmp.eq.s32.totalorder %s22, 0
      %p56 = por %p54, %p55
      %p57 = scmp.ne.s32.totalorder %s46, %s49
      %p58 = scmp.eq.s32.totalorder %s27, 1
      %p59 = por %p57, %p58
      %p60 = scmp.ne.s32.totalorder %s49, %s50
      %p61 = scmp.eq.s32.totalorder %s27, 0
      %p62 = por %p60, %p61
      %p63 = scmp.ne.s32.totalorder %s49, %s50
      %p64 = scmp.eq.s32.totalorder %s28, 1
      %p65 = por %p63, %p64
      %p67 = scmp.ne.s32.totalorder %s50, %s66
      %p68 = scmp.eq.s32.totalorder %s28, 0
      %p69 = por %p67, %p68
      %s70 = ssub.s32 %s29, %s41
      %s71 = ssub.s32 %s30, %s37
      %s72 = sor.u32 %s70, %s71
      %p73 = scmp.eq.s32.totalorder %s72, 0
      %s75 = sadd.s32 %s74, 1
      %s76 = scalar_select %p73, %s74, %s75
      %p79 = pneg %p73
      %p80 = scmp.eq.s32.totalorder %s22, 1
      %p81 = por %p79, %p80
      %p82 = scmp.ne.s32.totalorder %s74, %s77
      %p83 = scmp.eq.s32.totalorder %s22, 0
      %p84 = por %p82, %p83
      %p85 = scmp.ne.s32.totalorder %s74, %s77
      %p86 = scmp.eq.s32.totalorder %s27, 1
      %p87 = por %p85, %p86
      %p88 = scmp.ne.s32.totalorder %s77, %s78
      %p89 = scmp.eq.s32.totalorder %s27, 0
      %p90 = por %p88, %p89
      %p91 = scmp.ne.s32.totalorder %s77, %s78
      %p92 = scmp.eq.s32.totalorder %s28, 1
      %p93 = por %p91, %p92
      %p95 = scmp.ne.s32.totalorder %s78, %s94
      %p96 = scmp.eq.s32.totalorder %s28, 0
      %p97 = por %p95, %p96
      %s98 = ssub.s32 %s29, %s41
      %s99 = ssub.s32 %s30, %s37
      %s100 = sor.u32 %s98, %s99
      %p101 = scmp.eq.s32.totalorder %s100, 0
      %s103 = sadd.s32 %s102, 1
      %s104 = scalar_select %p101, %s102, %s103
      %p107 = pneg %p101
      %p108 = scmp.eq.s32.totalorder %s22, 1
      %p109 = por %p107, %p108
      %p110 = scmp.ne.s32.totalorder %s102, %s105
      %p111 = scmp.eq.s32.totalorder %s22, 0
      %p112 = por %p110, %p111
      %p113 = scmp.ne.s32.totalorder %s102, %s105
      %p114 = scmp.eq.s32.totalorder %s27, 1
      %p115 = por %p113, %p114
      %p116 = scmp.ne.s32.totalorder %s105, %s106
      %p117 = scmp.eq.s32.totalorder %s27, 0
      %p118 = por %p116, %p117
      %p119 = scmp.ne.s32.totalorder %s105, %s106
      %p120 = scmp.eq.s32.totalorder %s28, 1
      %p121 = por %p119, %p120
      %p123 = scmp.ne.s32.totalorder %s106, %s122
      %p124 = scmp.eq.s32.totalorder %s28, 0
      %p125 = por %p123, %p124
      %p126 = scmp.le.s32.totalorder 1, %s22
      %p127 = scmp.lt.s32.totalorder %s22, 3
      %p128 = pnand %p126, %p127
      %p129 = pneg %p128
      // Predicated region
      $region9: #{tpu_custom_call.1} parent=5 // pred_check
        _
      $region10: #{tpu_custom_call.1} parent=5 // pred_check_branch
        %131 = sbr.rel (%p128) target = $region12
      $region11: #{tpu_custom_call.1} parent=5 // pred_region
        %s132 = ssub.s32 %s22, 1
      $region12: #{tpu_custom_call.1} parent=5 // pred_fallthru
        _
      %p133 = scmp.lt.s32.totalorder %s22, 2
      // Predicated region
      $region13: #{tpu_custom_call.1} parent=5 // pred_check
        %p134 = pneg %p133
      $region14: #{tpu_custom_call.1} parent=5 // pred_check_branch
        %136 = sbr.rel (%p134) target = $region16
      $region15: #{tpu_custom_call.1} parent=5 // pred_region
        // Predicated region
        $region17: #{tpu_custom_call.1} parent=15 // pred_check
          %p137 = pneg %p56
        $region18: #{tpu_custom_call.1} parent=15 // pred_check_branch
          %139 = sbr.rel (%p137) target = $region20
        $region19: #{tpu_custom_call.1} parent=15 // pred_region
          %s140 = sand.u32 %s46, 1
          %s141 = scalar_lea.sflag [#allocation5], %s140
          %s142 = sand.u32 %s46, 1
          %s143 = smul.addr %s142, 8
          %s144 = scalar_lea.vmem [#allocation4], %s143
          %s145 = smul.u32 2, %s30
          %s147 = ssub.s32 128, 128
          %148 = vsyncadd %s141, %s147
          %s149 = smul.addr %s29, 2
          %s150 = sadd.s32 %s145, %s149
          %s151 = smul.addr %s150, 64
          %s152 = scalar_lea.hbm %s1, %s151
          %s154 = sshll.u32 %s144, 4
          %s155 = int_to_ptr.vmem [resolvable:$true] %s154
          %157 = dma.hbm_to_vmem [thread:$0]  %s152, 128, %s155, %s141
        $region20: #{tpu_custom_call.1} parent=15 // pred_fallthru
          _
        // Predicated region
        $region21: #{tpu_custom_call.1} parent=15 // pred_check
          %p158 = pneg %p84
        $region22: #{tpu_custom_call.1} parent=15 // pred_check_branch
          %160 = sbr.rel (%p158) target = $region24
        $region23: #{tpu_custom_call.1} parent=15 // pred_region
          %s161 = sand.u32 %s74, 1
          %s162 = scalar_lea.sflag [#allocation8], %s161
          %s163 = sand.u32 %s74, 1
          %s164 = smul.addr %s163, 8
          %s165 = scalar_lea.vmem [#allocation7], %s164
          %s166 = smul.u32 2, %s30
          %s168 = ssub.s32 128, 128
          %169 = vsyncadd %s162, %s168
          %s170 = smul.addr %s29, 2
          %s171 = sadd.s32 %s166, %s170
          %s172 = smul.addr %s171, 64
          %s173 = scalar_lea.hbm %s2, %s172
          %s175 = sshll.u32 %s165, 4
          %s176 = int_to_ptr.vmem [resolvable:$true] %s175
          %178 = dma.hbm_to_vmem [thread:$0]  %s173, 128, %s176, %s162
        $region24: #{tpu_custom_call.1} parent=15 // pred_fallthru
          _
      $region16: #{tpu_custom_call.1} parent=5 // pred_fallthru
        _
      %p179 = scmp.le.s32.totalorder 1, %s22
      %p180 = scmp.lt.s32.totalorder %s22, 3
      %p181 = pnand %p179, %p180
      %p182 = pneg %p181
      // Predicated region
      $region25: #{tpu_custom_call.1} parent=5 // pred_check
        _
      $region26: #{tpu_custom_call.1} parent=5 // pred_check_branch
        %184 = sbr.rel (%p181) target = $region28
      $region27: #{tpu_custom_call.1} parent=5 // pred_region
        %s185 = ssub.s32 %s22, 1
        %s186 = sand.u32 %s49, 1
        %s187 = scalar_lea.sflag [#allocation5], %s186
        %s188 = sand.u32 %s49, 1
        %s189 = smul.addr %s188, 8
        %s190 = scalar_lea.vmem [#allocation4], %s189
        // Predicated region
        $region29: #{tpu_custom_call.1} parent=27 // pred_check
          %p191 = pneg %p62
        $region30: #{tpu_custom_call.1} parent=27 // pred_check_branch
          %193 = sbr.rel (%p191) target = $region32
        $region31: #{tpu_custom_call.1} parent=27 // pred_region
          %194 = dma.done %s187, 128
        $region32: #{tpu_custom_call.1} parent=27 // pred_fallthru
          _
        %s195 = sand.u32 %s77, 1
        %s196 = scalar_lea.sflag [#allocation8], %s195
        %s197 = sand.u32 %s77, 1
        %s198 = smul.addr %s197, 8
        %s199 = scalar_lea.vmem [#allocation7], %s198
        // Predicated region
        $region33: #{tpu_custom_call.1} parent=27 // pred_check
          %p200 = pneg %p90
        $region34: #{tpu_custom_call.1} parent=27 // pred_check_branch
          %202 = sbr.rel (%p200) target = $region36
        $region35: #{tpu_custom_call.1} parent=27 // pred_region
          %203 = dma.done %s196, 128
        $region36: #{tpu_custom_call.1} parent=27 // pred_fallthru
          _
        %s204 = sand.u32 %s49, 1
        %s205 = scalar_lea.sflag [#allocation5], %s204
        %s206 = sand.u32 %s49, 1
        %s207 = smul.addr %s206, 8
        %s208 = scalar_lea.vmem [#allocation4], %s207
        %p209 = pneg %p62
        %p210 = pneg %p59
        %s211 = sand.u32 %s77, 1
        %s212 = scalar_lea.sflag [#allocation8], %s211
        %s213 = sand.u32 %s77, 1
        %s214 = smul.addr %s213, 8
        %s215 = scalar_lea.vmem [#allocation7], %s214
        %p216 = pneg %p90
        %p217 = pneg %p87
        %p218 = pneg %p118
        %p219 = pneg %p115
        %s220 = sand.u32 %s105, 1
        %s221 = scalar_lea.sflag [#allocation6], %s220
        %s222 = sand.u32 %s105, 1
        %s223 = smul.addr %s222, 16
        %s224 = scalar_lea.vmem [#allocation9], %s223
        %s225 = smul.u32 2, %s32
        %s226 = smul.u32 2, %s32
        %s227 = smul.u32 2, %s32
        %s228 = sld [smem:[#allocation3]]
        %s229 = sld [smem:[#allocation3 + $0x1]]
        %v230 = vld [vmem:[%s190] sm:$0xff]
        %v231 = vstv %s228
        %v232 = vmul.f32 %v231, %v230
        %v234 = vcombine.high %v232, %v232
        %236 = vst [vmem:[%s224] sm:$0xf] %v232
        %237 = vst [vmem:[%s224 + $0x8] sm:$0xf] %v234
        %v238 = vld [vmem:[%s199] sm:$0xff]
        %v239 = vstv %s229
        %v240 = vmul.f32 %v239, %v238
        %v242 = vcombine.low %v240, %v240
        %244 = vst [vmem:[%s224] sm:$0xf0] %v242
        %245 = vst [vmem:[%s224 + $0x8] sm:$0xf0] %v240
        %s246 = sand.u32 %s105, 1
        %s247 = scalar_lea.sflag [#allocation6], %s246
        %s248 = sand.u32 %s105, 1
        %s249 = smul.addr %s248, 16
        %s250 = scalar_lea.vmem [#allocation9], %s249
        // Predicated region
        $region37: #{tpu_custom_call.1} parent=27 // pred_check
          %p251 = pneg %p115
        $region38: #{tpu_custom_call.1} parent=27 // pred_check_branch
          %253 = sbr.rel (%p251) target = $region40
        $region39: #{tpu_custom_call.1} parent=27 // pred_region
          %s254 = smul.u32 2, %s32
          %s256 = ssub.s32 256, 256
          %257 = vsyncadd %s247, %s256
          %s258 = smul.addr %s31, 2
          %s259 = sadd.s32 %s254, %s258
          %s260 = smul.addr %s259, 128
          %s261 = scalar_lea.hbm %s3, %s260
          %s263 = sshll.u32 %s250, 4
          %s264 = int_to_ptr.vmem [resolvable:$true] %s263
          %266 = dma.vmem_to_hbm [thread:$0]  %s264, 256, %s261, %s247
        $region40: #{tpu_custom_call.1} parent=27 // pred_fallthru
          _
      $region28: #{tpu_custom_call.1} parent=5 // pred_fallthru
        _
      %p267 = scmp.le.s32.totalorder 2, %s22
      // Predicated region
      $region41: #{tpu_custom_call.1} parent=5 // pred_check
        %p268 = pneg %p267
      $region42: #{tpu_custom_call.1} parent=5 // pred_check_branch
        %270 = sbr.rel (%p268) target = $region44
      $region43: #{tpu_custom_call.1} parent=5 // pred_region
        %s271 = ssub.s32 %s22, 2
        // Predicated region
        $region45: #{tpu_custom_call.1} parent=43 // pred_check
          %p272 = pneg %p121
        $region46: #{tpu_custom_call.1} parent=43 // pred_check_branch
          %274 = sbr.rel (%p272) target = $region48
        $region47: #{tpu_custom_call.1} parent=43 // pred_region
          %s275 = sand.u32 %s106, 1
          %s276 = scalar_lea.sflag [#allocation6], %s275
          %s277 = sand.u32 %s106, 1
          %s278 = smul.addr %s277, 16
          %s279 = scalar_lea.vmem [#allocation9], %s278
          %280 = dma.done %s276, 256
        $region48: #{tpu_custom_call.1} parent=43 // pred_fallthru
          _
      $region44: #{tpu_custom_call.1} parent=5 // pred_fallthru
        _
    $region6: #{tpu_custom_call.1} parent=1 // loop_footer
      %s26 = sadd.s32 1, %s22
    $region7: #{tpu_custom_call.1} parent=1 // loop_footer_branch
      %21 = sbr.rel target = $region3
    $region8: #{tpu_custom_call.1} parent=1 // loop_exit
      _
    %281 = vsyncpa [#allocation5], 1
    %s282 = scalar_lea.sflag [#allocation5], 1
    %283 = vsyncpa %s282, 1
    %284 = vsyncpa [#allocation8], 1
    %s285 = scalar_lea.sflag [#allocation8], 1
    %286 = vsyncpa %s285, 1
    %287 = vsyncpa [#allocation6], 1
    %s288 = scalar_lea.sflag [#allocation6], 1
    %289 = vsyncpa %s288, 1

</llo_original>
